<compile_context>
chip_gen: v7x
topology: tpu7x:2x2x1
jax: 0.10.0
libtpu: 0.0.40
codegen_flags: <defaults>
</compile_context>

<pallas_src>
import jax
import jax.numpy as jnp
from jax.experimental import pallas as pl
from jax.experimental.pallas import tpu as pltpu


def _round_up(n, m):
    return ((n + m - 1) // m) * m


def customnet_kernel(x_ref, w1t_ref, b1c_ref, w2t_ref, b2c_ref, out_ref):
    # x_ref:   (2, TB)   batch-in-lanes input tile
    # w1t_ref: (H, 2)    fc1 weight (transposed), H = 20
    # b1c_ref: (H, 1)    fc1 bias as a column
    # w2t_ref: (C, H)    fc2 weight (transposed)
    # b2c_ref: (C, 1)    fc2 bias as a column
    # out_ref: (C, TB)   batch-in-lanes output tile (softmax probabilities)
    x0 = x_ref[0:1, :]                      # (1, TB)
    x1 = x_ref[1:2, :]                      # (1, TB)

    # ---- fc1 + tanh: K=2 matmul done as 2 broadcast FMAs on the VPU ----
    w1t = w1t_ref[...]                      # (H, 2)
    h = jnp.tanh(
        w1t[:, 0:1] * x0 + w1t[:, 1:2] * x1 + b1c_ref[...]
    )                                       # (H, TB)

    # ---- fc2: (C,H)@(H,TB) done as H broadcast FMAs on the VPU ----
    w2t = w2t_ref[...]                      # (C, H)
    H = w2t.shape[1]
    # bias broadcast happens once here (hoisted), then pure FMAs.
    logits = b2c_ref[...] + w2t[:, 0:1] * h[0:1, :]          # (C, TB)
    for j in range(1, H):                                    # static unroll
        logits = logits + w2t[:, j : j + 1] * h[j : j + 1, :]

    # ---- numerically stable softmax over the C (sublane) axis ----
    C = logits.shape[0]
    m = logits[0:1, :]
    for c in range(1, C):
        m = jnp.maximum(m, logits[c : c + 1, :])             # elementwise VPU
    e = jnp.exp(logits - m)                                  # EUP
    s = e[0:1, :]
    for c in range(1, C):
        s = s + e[c : c + 1, :]
    inv = pl.reciprocal(s, approx=True)                      # EUP slot
    inv = inv * (2.0 - s * inv)                              # one Newton step
    out_ref[...] = (e * inv).astype(out_ref.dtype)


def customnet_forward(x, w1, b1, w2, b2, *, tb_max=32768):
    """x: (B, 2) f32; w1: (2, 20); b1: (20,); w2: (20, C); b2: (C,) -> (B, C)."""
    B = x.shape[0]
    H = w1.shape[1]
    C = w2.shape[1]

    # Batch-in-lanes layout: transpose so the batch is the last (lane) dim.
    xT = x.T                                  # (2, B)
    w1t = w1.T                                # (H, 2)
    b1c = b1.reshape(H, 1)                    # (H, 1)
    w2t = w2.T                                # (C, H)
    b2c = b2.reshape(C, 1)                    # (C, 1)

    # Batch tile: multiple of 128 lanes; large enough to amortize the ~0.35us
    # per-step overhead, small enough for double-buffered tiles + the (H,TB)
    # hidden intermediate to fit comfortably in v7x's smaller VMEM.
    TB = min(tb_max, _round_up(B, 128))
    Bp = _round_up(B, TB)
    if Bp != B:
        xT = jnp.pad(xT, ((0, 0), (0, Bp - B)))   # zero-pad: stays finite

    grid = (Bp // TB,)
    out_t = pl.pallas_call(
        customnet_kernel,
        out_shape=jax.ShapeDtypeStruct((C, Bp), jnp.float32),
        grid_spec=pltpu.PrefetchScalarGridSpec(
            num_scalar_prefetch=0,
            grid=grid,
            in_specs=[
                # streamed, double-buffered batch tile
                pl.BlockSpec((2, TB), lambda i: (0, i)),
                # parameters: constant block index -> DMA'd once, VMEM-resident
                pl.BlockSpec((H, 2), lambda i: (0, 0)),
                pl.BlockSpec((H, 1), lambda i: (0, 0)),
                pl.BlockSpec((C, H), lambda i: (0, 0)),
                pl.BlockSpec((C, 1), lambda i: (0, 0)),
            ],
            out_specs=pl.BlockSpec((C, TB), lambda i: (0, i)),
        ),
        compiler_params=pltpu.CompilerParams(
            # independent batch tiles -> sharded across the 2 TCs on v7x
            dimension_semantics=("parallel",),
        ),
    )(xT, w1t, b1c, w2t, b2c)

    return out_t[:, :B].T                     # back to (B, C)


def init_params(key, num_classes):
    # Deterministic init mimicking nn.Linear default (uniform +-1/sqrt(fan_in)).
    k1, k2, k3, k4 = jax.random.split(key, 4)
    lim1 = 1.0 / jnp.sqrt(2.0)
    lim2 = 1.0 / jnp.sqrt(20.0)
    w1 = jax.random.uniform(k1, (2, 20), jnp.float32, -lim1, lim1)
    b1 = jax.random.uniform(k2, (20,), jnp.float32, -lim1, lim1)
    w2 = jax.random.uniform(k3, (20, num_classes), jnp.float32, -lim2, lim2)
    b2 = jax.random.uniform(k4, (num_classes,), jnp.float32, -lim2, lim2)
    return w1, b1, w2, b2


def reference_forward(x, w1, b1, w2, b2):
    h = jnp.tanh(x @ w1 + b1)
    logits = h @ w2 + b2
    return jax.nn.softmax(logits, axis=-1)


if __name__ == "__main__":
    num_classes = 5
    batch = 8

    key = jax.random.PRNGKey(0)
    k_x, k_p = jax.random.split(key)
    x = jax.random.normal(k_x, (batch, 2), jnp.float32)
    w1, b1, w2, b2 = init_params(k_p, num_classes)

    out = customnet_forward(x, w1, b1, w2, b2)
    out = jax.block_until_ready(out)

    ref = reference_forward(x, w1, b1, w2, b2)
    assert out.shape == (batch, num_classes)
    assert jnp.allclose(out, ref, atol=1e-4, rtol=1e-4)
    assert jnp.allclose(jnp.sum(out, axis=-1), 1.0, atol=1e-4)

    # Also exercise the multi-tile grid + batch-padding path with a small tile.
    batch2 = 300
    x2 = jax.random.normal(jax.random.PRNGKey(1), (batch2, 2), jnp.float32)
    out2 = jax.block_until_ready(
        customnet_forward(x2, w1, b1, w2, b2, tb_max=128)
    )
    ref2 = reference_forward(x2, w1, b1, w2, b2)
    assert out2.shape == (batch2, num_classes)
    assert jnp.allclose(out2, ref2, atol=1e-4, rtol=1e-4)

    print("KERNEL_OK")
</pallas_src>

<mosaic_0001>
module attributes {stable_mosaic.version = 11 : i64} {
  func.func @customnet_kernel(%arg0: i32, %arg1: memref<2x128xf32, #tpu.memory_space<vmem>>, %arg2: memref<20x2xf32, #tpu.memory_space<vmem>>, %arg3: memref<20x1xf32, #tpu.memory_space<vmem>>, %arg4: memref<5x20xf32, #tpu.memory_space<vmem>>, %arg5: memref<5x1xf32, #tpu.memory_space<vmem>>, %arg6: memref<5x128xf32, #tpu.memory_space<vmem>>) attributes {dimension_semantics = [#tpu.dimension_semantics<parallel>], iteration_bounds = array<i64: 1>, scalar_prefetch = 0 : i64, scratch_operands = 0 : i64, tpu.core_type = #tpu.core_type<tc>, window_params = [{transform_indices = @transform_0, window_bounds = array<i64: 2, 128>}, {pipeline_mode = #tpu.pipeline_mode<synchronous>, transform_indices = @transform_1, window_bounds = array<i64: 20, 2>}, {pipeline_mode = #tpu.pipeline_mode<synchronous>, transform_indices = @transform_2, window_bounds = array<i64: 20, 1>}, {pipeline_mode = #tpu.pipeline_mode<synchronous>, transform_indices = @transform_3, window_bounds = array<i64: 5, 20>}, {pipeline_mode = #tpu.pipeline_mode<synchronous>, transform_indices = @transform_4, window_bounds = array<i64: 5, 1>}, {transform_indices = @transform_5, window_bounds = array<i64: 5, 128>}]} {
    %c0 = arith.constant 0 : index
    %c0_0 = arith.constant 0 : index
    %0 = vector.load %arg1[%c0, %c0_0] : memref<2x128xf32, #tpu.memory_space<vmem>>, vector<1x128xf32>
    %c1 = arith.constant 1 : index
    %c0_1 = arith.constant 0 : index
    %1 = vector.load %arg1[%c1, %c0_1] : memref<2x128xf32, #tpu.memory_space<vmem>>, vector<1x128xf32>
    %c0_2 = arith.constant 0 : index
    %c0_3 = arith.constant 0 : index
    %2 = vector.load %arg2[%c0_2, %c0_3] : memref<20x2xf32, #tpu.memory_space<vmem>>, vector<20x2xf32>
    %3 = vector.extract_strided_slice %2 {offsets = [0, 0], sizes = [20, 1], strides = [1, 1]} : vector<20x2xf32> to vector<20x1xf32>
    %4 = vector.broadcast %3 : vector<20x1xf32> to vector<20x128xf32>
    %5 = vector.broadcast %0 : vector<1x128xf32> to vector<20x128xf32>
    %6 = arith.mulf %4, %5 : vector<20x128xf32>
    %7 = vector.extract_strided_slice %2 {offsets = [0, 1], sizes = [20, 1], strides = [1, 1]} : vector<20x2xf32> to vector<20x1xf32>
    %8 = vector.broadcast %7 : vector<20x1xf32> to vector<20x128xf32>
    %9 = vector.broadcast %1 : vector<1x128xf32> to vector<20x128xf32>
    %10 = arith.mulf %8, %9 : vector<20x128xf32>
    %11 = arith.addf %6, %10 : vector<20x128xf32>
    %c0_4 = arith.constant 0 : index
    %c0_5 = arith.constant 0 : index
    %12 = vector.load %arg3[%c0_4, %c0_5] : memref<20x1xf32, #tpu.memory_space<vmem>>, vector<20x1xf32>
    %13 = vector.broadcast %12 : vector<20x1xf32> to vector<20x128xf32>
    %14 = arith.addf %11, %13 : vector<20x128xf32>
    %15 = math.tanh %14 : vector<20x128xf32>
    %c0_6 = arith.constant 0 : index
    %c0_7 = arith.constant 0 : index
    %16 = vector.load %arg4[%c0_6, %c0_7] : memref<5x20xf32, #tpu.memory_space<vmem>>, vector<5x20xf32>
    %c0_8 = arith.constant 0 : index
    %c0_9 = arith.constant 0 : index
    %17 = vector.load %arg5[%c0_8, %c0_9] : memref<5x1xf32, #tpu.memory_space<vmem>>, vector<5x1xf32>
    %18 = vector.extract_strided_slice %16 {offsets = [0, 0], sizes = [5, 1], strides = [1, 1]} : vector<5x20xf32> to vector<5x1xf32>
    %19 = vector.extract_strided_slice %15 {offsets = [0, 0], sizes = [1, 128], strides = [1, 1]} : vector<20x128xf32> to vector<1x128xf32>
    %20 = vector.broadcast %18 : vector<5x1xf32> to vector<5x128xf32>
    %21 = vector.broadcast %19 : vector<1x128xf32> to vector<5x128xf32>
    %22 = arith.mulf %20, %21 : vector<5x128xf32>
    %23 = vector.broadcast %17 : vector<5x1xf32> to vector<5x128xf32>
    %24 = arith.addf %23, %22 : vector<5x128xf32>
    %25 = vector.extract_strided_slice %16 {offsets = [0, 1], sizes = [5, 1], strides = [1, 1]} : vector<5x20xf32> to vector<5x1xf32>
    %26 = vector.extract_strided_slice %15 {offsets = [1, 0], sizes = [1, 128], strides = [1, 1]} : vector<20x128xf32> to vector<1x128xf32>
    %27 = vector.broadcast %25 : vector<5x1xf32> to vector<5x128xf32>
    %28 = vector.broadcast %26 : vector<1x128xf32> to vector<5x128xf32>
    %29 = arith.mulf %27, %28 : vector<5x128xf32>
    %30 = arith.addf %24, %29 : vector<5x128xf32>
    %31 = vector.extract_strided_slice %16 {offsets = [0, 2], sizes = [5, 1], strides = [1, 1]} : vector<5x20xf32> to vector<5x1xf32>
    %32 = vector.extract_strided_slice %15 {offsets = [2, 0], sizes = [1, 128], strides = [1, 1]} : vector<20x128xf32> to vector<1x128xf32>
    %33 = vector.broadcast %31 : vector<5x1xf32> to vector<5x128xf32>
    %34 = vector.broadcast %32 : vector<1x128xf32> to vector<5x128xf32>
    %35 = arith.mulf %33, %34 : vector<5x128xf32>
    %36 = arith.addf %30, %35 : vector<5x128xf32>
    %37 = vector.extract_strided_slice %16 {offsets = [0, 3], sizes = [5, 1], strides = [1, 1]} : vector<5x20xf32> to vector<5x1xf32>
    %38 = vector.extract_strided_slice %15 {offsets = [3, 0], sizes = [1, 128], strides = [1, 1]} : vector<20x128xf32> to vector<1x128xf32>
    %39 = vector.broadcast %37 : vector<5x1xf32> to vector<5x128xf32>
    %40 = vector.broadcast %38 : vector<1x128xf32> to vector<5x128xf32>
    %41 = arith.mulf %39, %40 : vector<5x128xf32>
    %42 = arith.addf %36, %41 : vector<5x128xf32>
    %43 = vector.extract_strided_slice %16 {offsets = [0, 4], sizes = [5, 1], strides = [1, 1]} : vector<5x20xf32> to vector<5x1xf32>
    %44 = vector.extract_strided_slice %15 {offsets = [4, 0], sizes = [1, 128], strides = [1, 1]} : vector<20x128xf32> to vector<1x128xf32>
    %45 = vector.broadcast %43 : vector<5x1xf32> to vector<5x128xf32>
    %46 = vector.broadcast %44 : vector<1x128xf32> to vector<5x128xf32>
    %47 = arith.mulf %45, %46 : vector<5x128xf32>
    %48 = arith.addf %42, %47 : vector<5x128xf32>
    %49 = vector.extract_strided_slice %16 {offsets = [0, 5], sizes = [5, 1], strides = [1, 1]} : vector<5x20xf32> to vector<5x1xf32>
    %50 = vector.extract_strided_slice %15 {offsets = [5, 0], sizes = [1, 128], strides = [1, 1]} : vector<20x128xf32> to vector<1x128xf32>
    %51 = vector.broadcast %49 : vector<5x1xf32> to vector<5x128xf32>
    %52 = vector.broadcast %50 : vector<1x128xf32> to vector<5x128xf32>
    %53 = arith.mulf %51, %52 : vector<5x128xf32>
    %54 = arith.addf %48, %53 : vector<5x128xf32>
    %55 = vector.extract_strided_slice %16 {offsets = [0, 6], sizes = [5, 1], strides = [1, 1]} : vector<5x20xf32> to vector<5x1xf32>
    %56 = vector.extract_strided_slice %15 {offsets = [6, 0], sizes = [1, 128], strides = [1, 1]} : vector<20x128xf32> to vector<1x128xf32>
    %57 = vector.broadcast %55 : vector<5x1xf32> to vector<5x128xf32>
    %58 = vector.broadcast %56 : vector<1x128xf32> to vector<5x128xf32>
    %59 = arith.mulf %57, %58 : vector<5x128xf32>
    %60 = arith.addf %54, %59 : vector<5x128xf32>
    %61 = vector.extract_strided_slice %16 {offsets = [0, 7], sizes = [5, 1], strides = [1, 1]} : vector<5x20xf32> to vector<5x1xf32>
    %62 = vector.extract_strided_slice %15 {offsets = [7, 0], sizes = [1, 128], strides = [1, 1]} : vector<20x128xf32> to vector<1x128xf32>
    %63 = vector.broadcast %61 : vector<5x1xf32> to vector<5x128xf32>
    %64 = vector.broadcast %62 : vector<1x128xf32> to vector<5x128xf32>
    %65 = arith.mulf %63, %64 : vector<5x128xf32>
    %66 = arith.addf %60, %65 : vector<5x128xf32>
    %67 = vector.extract_strided_slice %16 {offsets = [0, 8], sizes = [5, 1], strides = [1, 1]} : vector<5x20xf32> to vector<5x1xf32>
    %68 = vector.extract_strided_slice %15 {offsets = [8, 0], sizes = [1, 128], strides = [1, 1]} : vector<20x128xf32> to vector<1x128xf32>
    %69 = vector.broadcast %67 : vector<5x1xf32> to vector<5x128xf32>
    %70 = vector.broadcast %68 : vector<1x128xf32> to vector<5x128xf32>
    %71 = arith.mulf %69, %70 : vector<5x128xf32>
    %72 = arith.addf %66, %71 : vector<5x128xf32>
    %73 = vector.extract_strided_slice %16 {offsets = [0, 9], sizes = [5, 1], strides = [1, 1]} : vector<5x20xf32> to vector<5x1xf32>
    %74 = vector.extract_strided_slice %15 {offsets = [9, 0], sizes = [1, 128], strides = [1, 1]} : vector<20x128xf32> to vector<1x128xf32>
    %75 = vector.broadcast %73 : vector<5x1xf32> to vector<5x128xf32>
    %76 = vector.broadcast %74 : vector<1x128xf32> to vector<5x128xf32>
    %77 = arith.mulf %75, %76 : vector<5x128xf32>
    %78 = arith.addf %72, %77 : vector<5x128xf32>
    %79 = vector.extract_strided_slice %16 {offsets = [0, 10], sizes = [5, 1], strides = [1, 1]} : vector<5x20xf32> to vector<5x1xf32>
    %80 = vector.extract_strided_slice %15 {offsets = [10, 0], sizes = [1, 128], strides = [1, 1]} : vector<20x128xf32> to vector<1x128xf32>
    %81 = vector.broadcast %79 : vector<5x1xf32> to vector<5x128xf32>
    %82 = vector.broadcast %80 : vector<1x128xf32> to vector<5x128xf32>
    %83 = arith.mulf %81, %82 : vector<5x128xf32>
    %84 = arith.addf %78, %83 : vector<5x128xf32>
    %85 = vector.extract_strided_slice %16 {offsets = [0, 11], sizes = [5, 1], strides = [1, 1]} : vector<5x20xf32> to vector<5x1xf32>
    %86 = vector.extract_strided_slice %15 {offsets = [11, 0], sizes = [1, 128], strides = [1, 1]} : vector<20x128xf32> to vector<1x128xf32>
    %87 = vector.broadcast %85 : vector<5x1xf32> to vector<5x128xf32>
    %88 = vector.broadcast %86 : vector<1x128xf32> to vector<5x128xf32>
    %89 = arith.mulf %87, %88 : vector<5x128xf32>
    %90 = arith.addf %84, %89 : vector<5x128xf32>
    %91 = vector.extract_strided_slice %16 {offsets = [0, 12], sizes = [5, 1], strides = [1, 1]} : vector<5x20xf32> to vector<5x1xf32>
    %92 = vector.extract_strided_slice %15 {offsets = [12, 0], sizes = [1, 128], strides = [1, 1]} : vector<20x128xf32> to vector<1x128xf32>
    %93 = vector.broadcast %91 : vector<5x1xf32> to vector<5x128xf32>
    %94 = vector.broadcast %92 : vector<1x128xf32> to vector<5x128xf32>
    %95 = arith.mulf %93, %94 : vector<5x128xf32>
    %96 = arith.addf %90, %95 : vector<5x128xf32>
    %97 = vector.extract_strided_slice %16 {offsets = [0, 13], sizes = [5, 1], strides = [1, 1]} : vector<5x20xf32> to vector<5x1xf32>
    %98 = vector.extract_strided_slice %15 {offsets = [13, 0], sizes = [1, 128], strides = [1, 1]} : vector<20x128xf32> to vector<1x128xf32>
    %99 = vector.broadcast %97 : vector<5x1xf32> to vector<5x128xf32>
    %100 = vector.broadcast %98 : vector<1x128xf32> to vector<5x128xf32>
    %101 = arith.mulf %99, %100 : vector<5x128xf32>
    %102 = arith.addf %96, %101 : vector<5x128xf32>
    %103 = vector.extract_strided_slice %16 {offsets = [0, 14], sizes = [5, 1], strides = [1, 1]} : vector<5x20xf32> to vector<5x1xf32>
    %104 = vector.extract_strided_slice %15 {offsets = [14, 0], sizes = [1, 128], strides = [1, 1]} : vector<20x128xf32> to vector<1x128xf32>
    %105 = vector.broadcast %103 : vector<5x1xf32> to vector<5x128xf32>
    %106 = vector.broadcast %104 : vector<1x128xf32> to vector<5x128xf32>
    %107 = arith.mulf %105, %106 : vector<5x128xf32>
    %108 = arith.addf %102, %107 : vector<5x128xf32>
    %109 = vector.extract_strided_slice %16 {offsets = [0, 15], sizes = [5, 1], strides = [1, 1]} : vector<5x20xf32> to vector<5x1xf32>
    %110 = vector.extract_strided_slice %15 {offsets = [15, 0], sizes = [1, 128], strides = [1, 1]} : vector<20x128xf32> to vector<1x128xf32>
    %111 = vector.broadcast %109 : vector<5x1xf32> to vector<5x128xf32>
    %112 = vector.broadcast %110 : vector<1x128xf32> to vector<5x128xf32>
    %113 = arith.mulf %111, %112 : vector<5x128xf32>
    %114 = arith.addf %108, %113 : vector<5x128xf32>
    %115 = vector.extract_strided_slice %16 {offsets = [0, 16], sizes = [5, 1], strides = [1, 1]} : vector<5x20xf32> to vector<5x1xf32>
    %116 = vector.extract_strided_slice %15 {offsets = [16, 0], sizes = [1, 128], strides = [1, 1]} : vector<20x128xf32> to vector<1x128xf32>
    %117 = vector.broadcast %115 : vector<5x1xf32> to vector<5x128xf32>
    %118 = vector.broadcast %116 : vector<1x128xf32> to vector<5x128xf32>
    %119 = arith.mulf %117, %118 : vector<5x128xf32>
    %120 = arith.addf %114, %119 : vector<5x128xf32>
    %121 = vector.extract_strided_slice %16 {offsets = [0, 17], sizes = [5, 1], strides = [1, 1]} : vector<5x20xf32> to vector<5x1xf32>
    %122 = vector.extract_strided_slice %15 {offsets = [17, 0], sizes = [1, 128], strides = [1, 1]} : vector<20x128xf32> to vector<1x128xf32>
    %123 = vector.broadcast %121 : vector<5x1xf32> to vector<5x128xf32>
    %124 = vector.broadcast %122 : vector<1x128xf32> to vector<5x128xf32>
    %125 = arith.mulf %123, %124 : vector<5x128xf32>
    %126 = arith.addf %120, %125 : vector<5x128xf32>
    %127 = vector.extract_strided_slice %16 {offsets = [0, 18], sizes = [5, 1], strides = [1, 1]} : vector<5x20xf32> to vector<5x1xf32>
    %128 = vector.extract_strided_slice %15 {offsets = [18, 0], sizes = [1, 128], strides = [1, 1]} : vector<20x128xf32> to vector<1x128xf32>
    %129 = vector.broadcast %127 : vector<5x1xf32> to vector<5x128xf32>
    %130 = vector.broadcast %128 : vector<1x128xf32> to vector<5x128xf32>
    %131 = arith.mulf %129, %130 : vector<5x128xf32>
    %132 = arith.addf %126, %131 : vector<5x128xf32>
    %133 = vector.extract_strided_slice %16 {offsets = [0, 19], sizes = [5, 1], strides = [1, 1]} : vector<5x20xf32> to vector<5x1xf32>
    %134 = vector.extract_strided_slice %15 {offsets = [19, 0], sizes = [1, 128], strides = [1, 1]} : vector<20x128xf32> to vector<1x128xf32>
    %135 = vector.broadcast %133 : vector<5x1xf32> to vector<5x128xf32>
    %136 = vector.broadcast %134 : vector<1x128xf32> to vector<5x128xf32>
    %137 = arith.mulf %135, %136 : vector<5x128xf32>
    %138 = arith.addf %132, %137 : vector<5x128xf32>
    %139 = vector.extract_strided_slice %138 {offsets = [0, 0], sizes = [1, 128], strides = [1, 1]} : vector<5x128xf32> to vector<1x128xf32>
    %140 = vector.extract_strided_slice %138 {offsets = [1, 0], sizes = [1, 128], strides = [1, 1]} : vector<5x128xf32> to vector<1x128xf32>
    %141 = arith.maximumf %139, %140 : vector<1x128xf32>
    %142 = vector.extract_strided_slice %138 {offsets = [2, 0], sizes = [1, 128], strides = [1, 1]} : vector<5x128xf32> to vector<1x128xf32>
    %143 = arith.maximumf %141, %142 : vector<1x128xf32>
    %144 = vector.extract_strided_slice %138 {offsets = [3, 0], sizes = [1, 128], strides = [1, 1]} : vector<5x128xf32> to vector<1x128xf32>
    %145 = arith.maximumf %143, %144 : vector<1x128xf32>
    %146 = vector.extract_strided_slice %138 {offsets = [4, 0], sizes = [1, 128], strides = [1, 1]} : vector<5x128xf32> to vector<1x128xf32>
    %147 = arith.maximumf %145, %146 : vector<1x128xf32>
    %148 = vector.broadcast %147 : vector<1x128xf32> to vector<5x128xf32>
    %149 = arith.subf %138, %148 : vector<5x128xf32>
    %150 = math.exp %149 : vector<5x128xf32>
    %151 = vector.extract_strided_slice %150 {offsets = [0, 0], sizes = [1, 128], strides = [1, 1]} : vector<5x128xf32> to vector<1x128xf32>
    %152 = vector.extract_strided_slice %150 {offsets = [1, 0], sizes = [1, 128], strides = [1, 1]} : vector<5x128xf32> to vector<1x128xf32>
    %153 = arith.addf %151, %152 : vector<1x128xf32>
    %154 = vector.extract_strided_slice %150 {offsets = [2, 0], sizes = [1, 128], strides = [1, 1]} : vector<5x128xf32> to vector<1x128xf32>
    %155 = arith.addf %153, %154 : vector<1x128xf32>
    %156 = vector.extract_strided_slice %150 {offsets = [3, 0], sizes = [1, 128], strides = [1, 1]} : vector<5x128xf32> to vector<1x128xf32>
    %157 = arith.addf %155, %156 : vector<1x128xf32>
    %158 = vector.extract_strided_slice %150 {offsets = [4, 0], sizes = [1, 128], strides = [1, 1]} : vector<5x128xf32> to vector<1x128xf32>
    %159 = arith.addf %157, %158 : vector<1x128xf32>
    %160 = tpu.reciprocal %159 {approx = true} : vector<1x128xf32> -> vector<1x128xf32>
    %161 = arith.mulf %159, %160 : vector<1x128xf32>
    %cst = arith.constant 2.000000e+00 : f32
    %162 = vector.broadcast %cst : f32 to vector<1x128xf32>
    %163 = arith.subf %162, %161 : vector<1x128xf32>
    %164 = arith.mulf %160, %163 : vector<1x128xf32>
    %165 = vector.broadcast %164 : vector<1x128xf32> to vector<5x128xf32>
    %166 = arith.mulf %150, %165 : vector<5x128xf32>
    %c0_10 = arith.constant 0 : index
    %c0_11 = arith.constant 0 : index
    %167 = vector.load %arg6[%c0_10, %c0_11] : memref<5x128xf32, #tpu.memory_space<vmem>>, vector<5x128xf32>
    tpu.vector_store %arg6[%c0_10, %c0_11], %166 {strides = array<i32>} : memref<5x128xf32, #tpu.memory_space<vmem>>, vector<5x128xf32>,
    return
  }
  func.func @transform_0(%arg0: i32) -> (i32, i32) {
    %c0_i32 = arith.constant 0 : i32
    %c0_i32_0 = arith.constant 0 : i32
    return %c0_i32, %arg0 : i32, i32
  }
  func.func @transform_1(%arg0: i32) -> (i32, i32) {
    %c0_i32 = arith.constant 0 : i32
    %c0_i32_0 = arith.constant 0 : i32
    %c0_i32_1 = arith.constant 0 : i32
    return %c0_i32, %c0_i32_0 : i32, i32
  }
  func.func @transform_2(%arg0: i32) -> (i32, i32) {
    %c0_i32 = arith.constant 0 : i32
    %c0_i32_0 = arith.constant 0 : i32
    %c0_i32_1 = arith.constant 0 : i32
    return %c0_i32, %c0_i32_0 : i32, i32
  }
  func.func @transform_3(%arg0: i32) -> (i32, i32) {
    %c0_i32 = arith.constant 0 : i32
    %c0_i32_0 = arith.constant 0 : i32
    %c0_i32_1 = arith.constant 0 : i32
    return %c0_i32, %c0_i32_0 : i32, i32
  }
  func.func @transform_4(%arg0: i32) -> (i32, i32) {
    %c0_i32 = arith.constant 0 : i32
    %c0_i32_0 = arith.constant 0 : i32
    %c0_i32_1 = arith.constant 0 : i32
    return %c0_i32, %c0_i32_0 : i32, i32
  }
  func.func @transform_5(%arg0: i32) -> (i32, i32) {
    %c0_i32 = arith.constant 0 : i32
    %c0_i32_0 = arith.constant 0 : i32
    return %c0_i32, %arg0 : i32, i32
  }
}

</mosaic_0001>

<llo_original>
// kernel: tpu_custom_call.1
$region0: #{tpu_custom_call.1}
  #allocation0 [shape = 'u32[]', space=smem, size = 0x4, offset = 0x4, fixed_abs, tag = 'smem constant byte address 0x4 - core index']
  #allocation1 [shape = 'u32[144,128]{1,0:T(1,128)}', space=vmem, size = 0x12000, scoped, tag = 'internal scratch']
  %s0 = inlined_call_operand.vmem [shape: f32[2,128], index: 0, kind: input, shape index: {}]
  %s1 = inlined_call_operand.vmem [shape: f32[20,2], index: 1, kind: input, shape index: {}]
  %s2 = inlined_call_operand.vmem [shape: f32[20,1], index: 2, kind: input, shape index: {}]
  %s3 = inlined_call_operand.vmem [shape: f32[5,20], index: 3, kind: input, shape index: {}]
  %s4 = inlined_call_operand.vmem [shape: f32[5,1], index: 4, kind: input, shape index: {}]
  %s5 = inlined_call_operand.hbm [shape: f32[5,128], index: 5, kind: output, shape index: {}]
  %s6 = sld [smem:[#allocation0]]
  $region30: #{tpu_custom_call.1} parent=0
    _
  %s8 = ssub.s32 1, %s6
  %s9 = scalar_select 0, %s8, %s6
  $region1: #{tpu_custom_call.1} parent=0
    #allocation2 [shape = 'u8[4096]{0}', space=vmem, size = 0x1000, scoped, tag = 'output window, operand 0, single buffered']
    #allocation3 [shape = 's32[1]{0}', space=sflag, size = 0x4, scoped, tag = 'scoped memory for tpu_custom_call.1']
    %10 = vsyncpa [#allocation3], 0
    // Predicated region
    $region2: #{tpu_custom_call.1} parent=1 // pred_check
      _
    $region3: #{tpu_custom_call.1} parent=1 // pred_check_branch
      %12 = sbr.rel (0) target = $region5
    $region4: #{tpu_custom_call.1} parent=1 // pred_region
      _
    $region5: #{tpu_custom_call.1} parent=1 // pred_fallthru
      _
    // Predicated region
    $region6: #{tpu_custom_call.1} parent=1 // pred_check
      _
    $region7: #{tpu_custom_call.1} parent=1 // pred_check_branch
      %14 = sbr.rel (0) target = $region9
    $region8: #{tpu_custom_call.1} parent=1 // pred_region
      _
    $region9: #{tpu_custom_call.1} parent=1 // pred_fallthru
      _
    // Predicated region
    $region10: #{tpu_custom_call.1} parent=1 // pred_check
      _
    $region11: #{tpu_custom_call.1} parent=1 // pred_check_branch
      %16 = sbr.rel (0) target = $region13
    $region12: #{tpu_custom_call.1} parent=1 // pred_region
      _
    $region13: #{tpu_custom_call.1} parent=1 // pred_fallthru
      _
    // Predicated region
    $region14: #{tpu_custom_call.1} parent=1 // pred_check
      _
    $region15: #{tpu_custom_call.1} parent=1 // pred_check_branch
      %18 = sbr.rel (0) target = $region17
    $region16: #{tpu_custom_call.1} parent=1 // pred_region
      _
    $region17: #{tpu_custom_call.1} parent=1 // pred_fallthru
      _
    // Predicated region
    $region18: #{tpu_custom_call.1} parent=1 // pred_check
      _
    $region19: #{tpu_custom_call.1} parent=1 // pred_check_branch
      %20 = sbr.rel (0) target = $region21
    $region20: #{tpu_custom_call.1} parent=1 // pred_region
      _
    $region21: #{tpu_custom_call.1} parent=1 // pred_fallthru
      _
    %v21 = vld [vmem:[%s0] sm:$0x1]
    %v22 = vld [vmem:[%s0 + $0x1] sm:$0x1]
    %v23 = vld [vmem:[%s1] sm:$0xff]
    %v24 = vld [vmem:[%s1 + $0x8] sm:$0xff]
    %v25 = vld [vmem:[%s1 + $0x10] sm:$0xf]
    %27 = vset.pattern.permute.xlu0 0
    %28 = vperm.xlu0 %27, %v23
    %v29 = vpop.permute.xlu0 %28
    %32 = vset.pattern.permute.xlu0 0
    %33 = vperm.xlu0 %32, %v24
    %v34 = vpop.permute.xlu0 %33
    %37 = vset.pattern.permute.xlu0 0
    %38 = vperm.xlu0 %37, %v25
    %v39 = vpop.permute.xlu0 %38
    %v41 = vlaneseq
    %v42 = vshrl.u32 %v41, 7
    %v43 = vsub.s32 0, %v42
    %v44 = vrot.slane %v21, %v43
    %v45 = vmul.f32 %v29, %v44
    %v46 = vmul.f32 %v34, %v44
    %v47 = vmul.f32 %v39, %v44
    %48 = vset.pattern.permute.xlu0 1
    %49 = vperm.xlu0 %48, %v23
    %v50 = vpop.permute.xlu0 %49
    %52 = vset.pattern.permute.xlu0 1
    %53 = vperm.xlu0 %52, %v24
    %v54 = vpop.permute.xlu0 %53
    %56 = vset.pattern.permute.xlu0 1
    %57 = vperm.xlu0 %56, %v25
    %v58 = vpop.permute.xlu0 %57
    %v60 = vlaneseq
    %v61 = vshrl.u32 %v60, 7
    %v62 = vsub.s32 0, %v61
    %v63 = vrot.slane %v22, %v62
    %v64 = vmul.f32 %v50, %v63
    %v65 = vmul.f32 %v54, %v63
    %v66 = vmul.f32 %v58, %v63
    %v67 = vadd.f32 %v45, %v64
    %v68 = vadd.f32 %v46, %v65
    %v69 = vadd.f32 %v47, %v66
    %v70 = vld [vmem:[%s2] sm:$0xff]
    %v71 = vld [vmem:[%s2 + $0x8] sm:$0xff]
    %v72 = vld [vmem:[%s2 + $0x10] sm:$0xf]
    %74 = vset.pattern.permute.xlu0 0
    %75 = vperm.xlu0 %74, %v70
    %v76 = vpop.permute.xlu0 %75
    %79 = vset.pattern.permute.xlu0 0
    %80 = vperm.xlu0 %79, %v71
    %v81 = vpop.permute.xlu0 %80
    %84 = vset.pattern.permute.xlu0 0
    %85 = vperm.xlu0 %84, %v72
    %v86 = vpop.permute.xlu0 %85
    %v88 = vadd.f32 %v67, %v76
    %v89 = vadd.f32 %v68, %v81
    %v90 = vadd.f32 %v69, %v86
    %v91 = vtanh.pop %v88
    %v92 = vtanh.pop %v89
    %v93 = vtanh.pop %v90
    %v94 = vld [vmem:[%s3] sm:$0x1f]
    %v95 = vld [vmem:[%s4] sm:$0x1f]
    %97 = vset.pattern.permute.xlu0 0
    %98 = vperm.xlu0 %97, %v94
    %v99 = vpop.permute.xlu0 %98
    %v101 = vlaneseq
    %v102 = vshrl.u32 %v101, 7
    %v103 = vsub.s32 0, %v102
    %v104 = vrot.slane %v91, %v103
    %v105 = vmul.f32 %v99, %v104
    %107 = vset.pattern.permute.xlu0 0
    %108 = vperm.xlu0 %107, %v95
    %v109 = vpop.permute.xlu0 %108
    %v111 = vadd.f32 %v109, %v105
    %112 = vset.pattern.permute.xlu0 1
    %113 = vperm.xlu0 %112, %v94
    %v114 = vpop.permute.xlu0 %113
    %v116 = vlaneseq
    %v117 = vshrl.u32 %v116, 7
    %v118 = vsub.s32 1, %v117
    %v119 = vrot.slane %v91, %v118
    %v120 = vmul.f32 %v114, %v119
    %v121 = vadd.f32 %v111, %v120
    %122 = vset.pattern.permute.xlu0 2
    %123 = vperm.xlu0 %122, %v94
    %v124 = vpop.permute.xlu0 %123
    %v126 = vlaneseq
    %v127 = vshrl.u32 %v126, 7
    %v128 = vsub.s32 2, %v127
    %v129 = vrot.slane %v91, %v128
    %v130 = vmul.f32 %v124, %v129
    %v131 = vadd.f32 %v121, %v130
    %132 = vset.pattern.permute.xlu0 3
    %133 = vperm.xlu0 %132, %v94
    %v134 = vpop.permute.xlu0 %133
    %v136 = vlaneseq
    %v137 = vshrl.u32 %v136, 7
    %v138 = vsub.s32 3, %v137
    %v139 = vrot.slane %v91, %v138
    %v140 = vmul.f32 %v134, %v139
    %v141 = vadd.f32 %v131, %v140
    %142 = vset.pattern.permute.xlu0 4
    %143 = vperm.xlu0 %142, %v94
    %v144 = vpop.permute.xlu0 %143
    %v146 = vlaneseq
    %v147 = vshrl.u32 %v146, 7
    %v148 = vsub.s32 4, %v147
    %v149 = vrot.slane %v91, %v148
    %v150 = vmul.f32 %v144, %v149
    %v151 = vadd.f32 %v141, %v150
    %152 = vset.pattern.permute.xlu0 5
    %153 = vperm.xlu0 %152, %v94
    %v154 = vpop.permute.xlu0 %153
    %v156 = vlaneseq
    %v157 = vshrl.u32 %v156, 7
    %v158 = vsub.s32 5, %v157
    %v159 = vrot.slane %v91, %v158
    %v160 = vmul.f32 %v154, %v159
    %v161 = vadd.f32 %v151, %v160
    %162 = vset.pattern.permute.xlu0 6
    %163 = vperm.xlu0 %162, %v94
    %v164 = vpop.permute.xlu0 %163
    %v166 = vlaneseq
    %v167 = vshrl.u32 %v166, 7
    %v168 = vsub.s32 6, %v167
    %v169 = vrot.slane %v91, %v168
    %v170 = vmul.f32 %v164, %v169
    %v171 = vadd.f32 %v161, %v170
    %172 = vset.pattern.permute.xlu0 7
    %173 = vperm.xlu0 %172, %v94
    %v174 = vpop.permute.xlu0 %173
    %v176 = vlaneseq
    %v177 = vshrl.u32 %v176, 7
    %v178 = vsub.s32 7, %v177
    %v179 = vrot.slane %v91, %v178
    %v180 = vmul.f32 %v174, %v179
    %v181 = vadd.f32 %v171, %v180
    %182 = vset.pattern.permute.xlu0 8
    %183 = vperm.xlu0 %182, %v94
    %v184 = vpop.permute.xlu0 %183
    %v186 = vlaneseq
    %v187 = vshrl.u32 %v186, 7
    %v188 = vsub.s32 0, %v187
    %v189 = vrot.slane %v92, %v188
    %v190 = vmul.f32 %v184, %v189
    %v191 = vadd.f32 %v181, %v190
    %192 = vset.pattern.permute.xlu0 9
    %193 = vperm.xlu0 %192, %v94
    %v194 = vpop.permute.xlu0 %193
    %v196 = vlaneseq
    %v197 = vshrl.u32 %v196, 7
    %v198 = vsub.s32 1, %v197
    %v199 = vrot.slane %v92, %v198
    %v200 = vmul.f32 %v194, %v199
    %v201 = vadd.f32 %v191, %v200
    %202 = vset.pattern.permute.xlu0 10
    %203 = vperm.xlu0 %202, %v94
    %v204 = vpop.permute.xlu0 %203
    %v206 = vlaneseq
    %v207 = vshrl.u32 %v206, 7
    %v208 = vsub.s32 2, %v207
    %v209 = vrot.slane %v92, %v208
    %v210 = vmul.f32 %v204, %v209
    %v211 = vadd.f32 %v201, %v210
    %212 = vset.pattern.permute.xlu0 11
    %213 = vperm.xlu0 %212, %v94
    %v214 = vpop.permute.xlu0 %213
    %v216 = vlaneseq
    %v217 = vshrl.u32 %v216, 7
    %v218 = vsub.s32 3, %v217
    %v219 = vrot.slane %v92, %v218
    %v220 = vmul.f32 %v214, %v219
    %v221 = vadd.f32 %v211, %v220
    %222 = vset.pattern.permute.xlu0 12
    %223 = vperm.xlu0 %222, %v94
    %v224 = vpop.permute.xlu0 %223
    %v226 = vlaneseq
    %v227 = vshrl.u32 %v226, 7
    %v228 = vsub.s32 4, %v227
    %v229 = vrot.slane %v92, %v228
    %v230 = vmul.f32 %v224, %v229
    %v231 = vadd.f32 %v221, %v230
    %232 = vset.pattern.permute.xlu0 13
    %233 = vperm.xlu0 %232, %v94
    %v234 = vpop.permute.xlu0 %233
    %v236 = vlaneseq
    %v237 = vshrl.u32 %v236, 7
    %v238 = vsub.s32 5, %v237
    %v239 = vrot.slane %v92, %v238
    %v240 = vmul.f32 %v234, %v239
    %v241 = vadd.f32 %v231, %v240
    %242 = vset.pattern.permute.xlu0 14
    %243 = vperm.xlu0 %242, %v94
    %v244 = vpop.permute.xlu0 %243
    %v246 = vlaneseq
    %v247 = vshrl.u32 %v246, 7
    %v248 = vsub.s32 6, %v247
    %v249 = vrot.slane %v92, %v248
    %v250 = vmul.f32 %v244, %v249
    %v251 = vadd.f32 %v241, %v250
    %252 = vset.pattern.permute.xlu0 15
    %253 = vperm.xlu0 %252, %v94
    %v254 = vpop.permute.xlu0 %253
    %v256 = vlaneseq
    %v257 = vshrl.u32 %v256, 7
    %v258 = vsub.s32 7, %v257
    %v259 = vrot.slane %v92, %v258
    %v260 = vmul.f32 %v254, %v259
    %v261 = vadd.f32 %v251, %v260
    %262 = vset.pattern.permute.xlu0 16
    %263 = vperm.xlu0 %262, %v94
    %v264 = vpop.permute.xlu0 %263
    %v266 = vlaneseq
    %v267 = vshrl.u32 %v266, 7
    %v268 = vsub.s32 0, %v267
    %v269 = vrot.slane %v93, %v268
    %v270 = vmul.f32 %v264, %v269
    %v271 = vadd.f32 %v261, %v270
    %272 = vset.pattern.permute.xlu0 17
    %273 = vperm.xlu0 %272, %v94
    %v274 = vpop.permute.xlu0 %273
    %v276 = vlaneseq
    %v277 = vshrl.u32 %v276, 7
    %v278 = vsub.s32 1, %v277
    %v279 = vrot.slane %v93, %v278
    %v280 = vmul.f32 %v274, %v279
    %v281 = vadd.f32 %v271, %v280
    %282 = vset.pattern.permute.xlu0 18
    %283 = vperm.xlu0 %282, %v94
    %v284 = vpop.permute.xlu0 %283
    %v286 = vlaneseq
    %v287 = vshrl.u32 %v286, 7
    %v288 = vsub.s32 2, %v287
    %v289 = vrot.slane %v93, %v288
    %v290 = vmul.f32 %v284, %v289
    %v291 = vadd.f32 %v281, %v290
    %292 = vset.pattern.permute.xlu0 19
    %293 = vperm.xlu0 %292, %v94
    %v294 = vpop.permute.xlu0 %293
    %v296 = vlaneseq
    %v297 = vshrl.u32 %v296, 7
    %v298 = vsub.s32 3, %v297
    %v299 = vrot.slane %v93, %v298
    %v300 = vmul.f32 %v294, %v299
    %v301 = vadd.f32 %v291, %v300
    %v303 = vrot.slane %v301, 1
    %v305 = vmax.f32 %v301, %v303
    %v306 = vrot.slane %v301, 2
    %v308 = vmax.f32 %v305, %v306
    %v309 = vrot.slane %v301, 3
    %v311 = vmax.f32 %v308, %v309
    %v312 = vrot.slane %v301, 4
    %v314 = vmax.f32 %v311, %v312
    %v315 = vlaneseq
    %v316 = vshrl.u32 %v315, 7
    %v317 = vsub.s32 0, %v316
    %v318 = vrot.slane %v314, %v317
    %v319 = vsub.f32 %v301, %v318
    %v320 = vmul.f32 %v319, 1.442695
    %v321 = vpow.pop %v320
    %v323 = vrot.slane %v321, 1
    %v325 = vadd.f32 %v321, %v323
    %v326 = vrot.slane %v321, 2
    %v328 = vadd.f32 %v325, %v326
    %v329 = vrot.slane %v321, 3
    %v331 = vadd.f32 %v328, %v329
    %v332 = vrot.slane %v321, 4
    %v334 = vadd.f32 %v331, %v332
    %v335 = vrcp.pop %v334
    %v336 = vmul.f32 %v334, %v335
    %v337 = vsub.f32 2.0, %v336
    %v338 = vmul.f32 %v335, %v337
    %v339 = vlaneseq
    %v340 = vshrl.u32 %v339, 7
    %v341 = vsub.s32 0, %v340
    %v342 = vrot.slane %v338, %v341
    %v343 = vmul.f32 %v321, %v342
    %344 = vst [vmem:[#allocation2] sm:$0x1f] %v343
    // Predicated region
    $region22: #{tpu_custom_call.1} parent=1 // pred_check
      _
    $region23: #{tpu_custom_call.1} parent=1 // pred_check_branch
      %346 = sbr.rel (0) target = $region25
    $region24: #{tpu_custom_call.1} parent=1 // pred_region
      %s348 = ssub.s32 128, 128
      %349 = vsyncadd [#allocation3], %s348
      %s351 = sshll.u32 [#allocation2], 4
      %s352 = int_to_ptr.vmem [resolvable:$true] %s351
      %354 = dma.vmem_to_hbm [thread:$0]  %s352, 128, %s5, [#allocation3]
    $region25: #{tpu_custom_call.1} parent=1 // pred_fallthru
      _
    // Predicated region
    $region26: #{tpu_custom_call.1} parent=1 // pred_check
      _
    $region27: #{tpu_custom_call.1} parent=1 // pred_check_branch
      %356 = sbr.rel (0) target = $region29
    $region28: #{tpu_custom_call.1} parent=1 // pred_region
      %357 = dma.done [#allocation3], 128
    $region29: #{tpu_custom_call.1} parent=1 // pred_fallthru
      _
    %358 = vsyncpa [#allocation3], 1

</llo_original>
